<compile_context>
chip_gen: v7x
topology: tpu7x:2x2x1
jax: 0.10.0
libtpu: 0.0.40
codegen_flags: <defaults>
</compile_context>

<pallas_src>
import functools

import jax
import jax.numpy as jnp
from jax import lax
from jax.experimental import pallas as pl
from jax.experimental.pallas import tpu as pltpu

ELU_ALPHA = 0.05


def _elu(v, alpha=ELU_ALPHA):
    # Clamp so exp() never sees large positive values on the untaken branch.
    return jnp.where(v > 0, v, alpha * (jnp.exp(jnp.minimum(v, 0.0)) - 1.0))


def _roll_lanes(v, shift):
    """result[:, i] = v[:, (i - shift) % D], static shift, via slice+concat."""
    d = v.shape[-1]
    s = shift % d
    if s == 0:
        return v
    return jnp.concatenate([v[:, d - s:], v[:, :d - s]], axis=-1)


def _bitonic_sort_rows(x):
    """Ascending per-row sort of a (TB, D) block with a bitonic
    compare-exchange network: ~log^2(D) passes of min/max/select instead of
    the O(D^2) rank network with (TB, D, D) intermediates."""
    tb, d = x.shape
    dp = 1 << max(1, (d - 1).bit_length())   # next power of two
    a = x
    if dp != d:                               # pad lanes with +inf (sorts last)
        pad = jnp.full((tb, dp - d), jnp.inf, dtype=x.dtype)
        a = jnp.concatenate([x, pad], axis=-1)

    lane = lax.broadcasted_iota(jnp.int32, (tb, dp), 1)

    k = 2
    while k <= dp:                            # statically unrolled at trace time
        j = k // 2
        while j >= 1:
            lower = (lane & j) == 0           # this lane's partner is at i + j
            fwd = _roll_lanes(a, -j)          # a[:, i + j]
            bwd = _roll_lanes(a, j)           # a[:, i - j]
            partner = jnp.where(lower, fwd, bwd)
            # keep min iff bit j and bit k of the lane index agree
            m = lane & (j | k)
            take_min = (m == 0) | (m == (j | k))
            a = jnp.where(take_min,
                          jnp.minimum(a, partner),
                          jnp.maximum(a, partner))
            j //= 2
        k *= 2

    return a[:, :d] if dp != d else a


def discriminator_kernel(x_ref, w1_ref, b1_ref, w2_ref, b2_ref, w3_ref,
                         b3_ref, o_ref, *, matmul_dtype):
    x = x_ref[...]                            # (TB, D) float32

    # ---- torch.sort(x, dim=1, descending=False): values only ---------------
    y = _bitonic_sort_rows(x)

    # ---- l1: Linear(D, H) + ELU(0.05) ---------------------------------------
    h1 = jnp.dot(y.astype(matmul_dtype), w1_ref[...].astype(matmul_dtype),
                 preferred_element_type=jnp.float32)
    h1 = _elu(h1 + b1_ref[...])

    # ---- l2: Linear(H, H) + ELU(0.05) ---------------------------------------
    h2 = jnp.dot(h1.astype(matmul_dtype), w2_ref[...].astype(matmul_dtype),
                 preferred_element_type=jnp.float32)
    h2 = _elu(h2 + b2_ref[...])

    # ---- l3: Linear(H, 1) + sigmoid ------------------------------------------
    # N=1 matmul wastes the MXU: do a VPU multiply + lane reduction instead.
    o = jnp.sum(h2 * w3_ref[...], axis=-1, keepdims=True)     # (TB, 1)
    o = o + b3_ref[0, 0]                                       # scalar from SMEM
    o_ref[...] = 1.0 / (1.0 + jnp.exp(-o))


def discriminator_forward(x, params, *, block_batch=256,
                          matmul_dtype=jnp.float32):
    """x: (B, data_dim) float32. params: dict of W1,b1,W2,b2,W3,b3.

    block_batch: batch tile size (kept modest so the tile + double buffers fit
    v7x's 64 MiB VMEM as well as v5e/v6e). matmul_dtype=jnp.bfloat16 is a
    cheap win on v6e/v7x when 1e-5 exactness is not required.
    """
    B, D = x.shape
    H = params["W1"].shape[1]

    if B <= block_batch:
        tb = B                                 # full-dim block (always legal)
    else:
        tb = max(8, (block_batch // 8) * 8)    # second-minor dim multiple of 8
    grid = (pl.cdiv(B, tb),)

    kernel = functools.partial(discriminator_kernel, matmul_dtype=matmul_dtype)

    args = (
        x,
        params["W1"], params["b1"].reshape(1, H),
        params["W2"], params["b2"].reshape(1, H),
        params["W3"].reshape(1, H),            # row vector for the VPU reduce
        params["b3"].reshape(1, 1),            # scalar bias -> SMEM
    )

    in_specs = [
        pl.BlockSpec((tb, D), lambda i: (i, 0)),              # x: pipelined tiles
        pl.BlockSpec((D, H), lambda i: (0, 0)),               # W1: resident
        pl.BlockSpec((1, H), lambda i: (0, 0)),               # b1
        pl.BlockSpec((H, H), lambda i: (0, 0)),               # W2
        pl.BlockSpec((1, H), lambda i: (0, 0)),               # b2
        pl.BlockSpec((1, H), lambda i: (0, 0)),               # W3 row
        pl.BlockSpec(memory_space=pltpu.MemorySpace.SMEM),    # b3 scalar
    ]
    # TODO(synk): for very large B a lane-dense (ceil(B/128), 128) output slab
    # would avoid masked width-1 stores; kept (B, 1) here for simplicity.
    out_specs = pl.BlockSpec((tb, 1), lambda i: (i, 0))

    return pl.pallas_call(
        kernel,
        grid=grid,
        in_specs=in_specs,
        out_specs=out_specs,
        out_shape=jax.ShapeDtypeStruct((B, 1), jnp.float32),
        compiler_params=pltpu.CompilerParams(
            dimension_semantics=("parallel",)),
    )(*args)


def init_params(key, data_dim, hidden_size):
    """Deterministic init mimicking torch.nn.Linear default: U(-1/sqrt(fan_in), +)."""
    ks = jax.random.split(key, 6)

    def lin(kw, kb, fan_in, fan_out):
        bound = 1.0 / jnp.sqrt(fan_in)
        W = jax.random.uniform(kw, (fan_in, fan_out), jnp.float32, -bound, bound)
        b = jax.random.uniform(kb, (fan_out,), jnp.float32, -bound, bound)
        return W, b

    W1, b1 = lin(ks[0], ks[1], data_dim, hidden_size)
    W2, b2 = lin(ks[2], ks[3], hidden_size, hidden_size)
    W3, b3 = lin(ks[4], ks[5], hidden_size, 1)
    return dict(W1=W1, b1=b1, W2=W2, b2=b2, W3=W3, b3=b3)


def reference_forward(x, p):
    y = jnp.sort(x, axis=1)
    h1 = _elu(y @ p["W1"] + p["b1"])
    h2 = _elu(h1 @ p["W2"] + p["b2"])
    o = h2 @ p["W3"] + p["b3"]
    return jax.nn.sigmoid(o)


if __name__ == "__main__":
    batch, data_dim, hidden_size = 4, 16, 32
    key = jax.random.PRNGKey(0)
    k_x, k_p, k_x2 = jax.random.split(key, 3)

    x = jax.random.normal(k_x, (batch, data_dim), jnp.float32)
    params = init_params(k_p, data_dim, hidden_size)

    out = jax.block_until_ready(discriminator_forward(x, params))
    ref = reference_forward(x, params)
    assert out.shape == (batch, 1)
    assert jnp.allclose(out, ref, atol=1e-5, rtol=1e-5), (out, ref)

    # Exercise the batch-tiled, pipelined grid path (multiple + partial tiles).
    x2 = jax.random.normal(k_x2, (40, data_dim), jnp.float32)
    out2 = jax.block_until_ready(
        discriminator_forward(x2, params, block_batch=16))
    ref2 = reference_forward(x2, params)
    assert out2.shape == (40, 1)
    assert jnp.allclose(out2, ref2, atol=1e-5, rtol=1e-5), (out2, ref2)

    print("KERNEL_OK")
</pallas_src>

<mosaic_0001>
module attributes {stable_mosaic.version = 11 : i64} {
  func.func @discriminator_kernel(%arg0: i32, %arg1: memref<4x16xf32, #tpu.memory_space<vmem>>, %arg2: memref<16x32xf32, #tpu.memory_space<vmem>>, %arg3: memref<1x32xf32, #tpu.memory_space<vmem>>, %arg4: memref<32x32xf32, #tpu.memory_space<vmem>>, %arg5: memref<1x32xf32, #tpu.memory_space<vmem>>, %arg6: memref<1x32xf32, #tpu.memory_space<vmem>>, %arg7: memref<1x1xf32, #tpu.memory_space<smem>>, %arg8: memref<4x1xf32, #tpu.memory_space<vmem>>) attributes {dimension_semantics = [#tpu.dimension_semantics<parallel>], iteration_bounds = array<i64: 1>, scalar_prefetch = 0 : i64, scratch_operands = 0 : i64, tpu.core_type = #tpu.core_type<tc>, window_params = [{transform_indices = @transform_0, window_bounds = array<i64: 4, 16>}, {pipeline_mode = #tpu.pipeline_mode<synchronous>, transform_indices = @transform_1, window_bounds = array<i64: 16, 32>}, {pipeline_mode = #tpu.pipeline_mode<synchronous>, transform_indices = @transform_2, window_bounds = array<i64: 1, 32>}, {pipeline_mode = #tpu.pipeline_mode<synchronous>, transform_indices = @transform_3, window_bounds = array<i64: 32, 32>}, {pipeline_mode = #tpu.pipeline_mode<synchronous>, transform_indices = @transform_4, window_bounds = array<i64: 1, 32>}, {pipeline_mode = #tpu.pipeline_mode<synchronous>, transform_indices = @transform_5, window_bounds = array<i64: 1, 32>}, {transform_indices = @transform_6, window_bounds = array<i64: 1, 1>}, {transform_indices = @transform_7, window_bounds = array<i64: 4, 1>}]} {
    %c0 = arith.constant 0 : index
    %c0_0 = arith.constant 0 : index
    %0 = vector.load %arg1[%c0, %c0_0] : memref<4x16xf32, #tpu.memory_space<vmem>>, vector<4x16xf32>
    %1 = tpu.iota {dimensions = array<i32: 1>} : vector<4x16xi32>
    %c1_i32 = arith.constant 1 : i32
    %2 = vector.broadcast %c1_i32 : i32 to vector<4x16xi32>
    %3 = arith.andi %1, %2 : vector<4x16xi32>
    %c0_i32 = arith.constant 0 : i32
    %4 = vector.broadcast %c0_i32 : i32 to vector<4x16xi32>
    %5 = arith.cmpi eq, %3, %4 : vector<4x16xi32>
    %6 = vector.extract_strided_slice %0 {offsets = [0, 1], sizes = [4, 15], strides = [1, 1]} : vector<4x16xf32> to vector<4x15xf32>
    %7 = vector.extract_strided_slice %0 {offsets = [0, 0], sizes = [4, 1], strides = [1, 1]} : vector<4x16xf32> to vector<4x1xf32>
    %8 = tpu.concatenate %6, %7 in 1 : vector<4x15xf32>, vector<4x1xf32> -> vector<4x16xf32>
    %9 = vector.extract_strided_slice %0 {offsets = [0, 15], sizes = [4, 1], strides = [1, 1]} : vector<4x16xf32> to vector<4x1xf32>
    %10 = vector.extract_strided_slice %0 {offsets = [0, 0], sizes = [4, 15], strides = [1, 1]} : vector<4x16xf32> to vector<4x15xf32>
    %11 = tpu.concatenate %9, %10 in 1 : vector<4x1xf32>, vector<4x15xf32> -> vector<4x16xf32>
    %12 = arith.select %5, %8, %11 : vector<4x16xi1>, vector<4x16xf32>
    %c3_i32 = arith.constant 3 : i32
    %13 = vector.broadcast %c3_i32 : i32 to vector<4x16xi32>
    %14 = arith.andi %1, %13 : vector<4x16xi32>
    %c0_i32_1 = arith.constant 0 : i32
    %15 = vector.broadcast %c0_i32_1 : i32 to vector<4x16xi32>
    %16 = arith.cmpi eq, %14, %15 : vector<4x16xi32>
    %c3_i32_2 = arith.constant 3 : i32
    %17 = vector.broadcast %c3_i32_2 : i32 to vector<4x16xi32>
    %18 = arith.cmpi eq, %14, %17 : vector<4x16xi32>
    %19 = arith.ori %16, %18 : vector<4x16xi1>
    %20 = arith.minimumf %0, %12 : vector<4x16xf32>
    %21 = arith.maximumf %0, %12 : vector<4x16xf32>
    %22 = arith.select %19, %20, %21 : vector<4x16xi1>, vector<4x16xf32>
    %c2_i32 = arith.constant 2 : i32
    %23 = vector.broadcast %c2_i32 : i32 to vector<4x16xi32>
    %24 = arith.andi %1, %23 : vector<4x16xi32>
    %c0_i32_3 = arith.constant 0 : i32
    %25 = vector.broadcast %c0_i32_3 : i32 to vector<4x16xi32>
    %26 = arith.cmpi eq, %24, %25 : vector<4x16xi32>
    %27 = vector.extract_strided_slice %22 {offsets = [0, 2], sizes = [4, 14], strides = [1, 1]} : vector<4x16xf32> to vector<4x14xf32>
    %28 = vector.extract_strided_slice %22 {offsets = [0, 0], sizes = [4, 2], strides = [1, 1]} : vector<4x16xf32> to vector<4x2xf32>
    %29 = tpu.concatenate %27, %28 in 1 : vector<4x14xf32>, vector<4x2xf32> -> vector<4x16xf32>
    %30 = vector.extract_strided_slice %22 {offsets = [0, 14], sizes = [4, 2], strides = [1, 1]} : vector<4x16xf32> to vector<4x2xf32>
    %31 = vector.extract_strided_slice %22 {offsets = [0, 0], sizes = [4, 14], strides = [1, 1]} : vector<4x16xf32> to vector<4x14xf32>
    %32 = tpu.concatenate %30, %31 in 1 : vector<4x2xf32>, vector<4x14xf32> -> vector<4x16xf32>
    %33 = arith.select %26, %29, %32 : vector<4x16xi1>, vector<4x16xf32>
    %c6_i32 = arith.constant 6 : i32
    %34 = vector.broadcast %c6_i32 : i32 to vector<4x16xi32>
    %35 = arith.andi %1, %34 : vector<4x16xi32>
    %c0_i32_4 = arith.constant 0 : i32
    %36 = vector.broadcast %c0_i32_4 : i32 to vector<4x16xi32>
    %37 = arith.cmpi eq, %35, %36 : vector<4x16xi32>
    %c6_i32_5 = arith.constant 6 : i32
    %38 = vector.broadcast %c6_i32_5 : i32 to vector<4x16xi32>
    %39 = arith.cmpi eq, %35, %38 : vector<4x16xi32>
    %40 = arith.ori %37, %39 : vector<4x16xi1>
    %41 = arith.minimumf %22, %33 : vector<4x16xf32>
    %42 = arith.maximumf %22, %33 : vector<4x16xf32>
    %43 = arith.select %40, %41, %42 : vector<4x16xi1>, vector<4x16xf32>
    %c1_i32_6 = arith.constant 1 : i32
    %44 = vector.broadcast %c1_i32_6 : i32 to vector<4x16xi32>
    %45 = arith.andi %1, %44 : vector<4x16xi32>
    %c0_i32_7 = arith.constant 0 : i32
    %46 = vector.broadcast %c0_i32_7 : i32 to vector<4x16xi32>
    %47 = arith.cmpi eq, %45, %46 : vector<4x16xi32>
    %48 = vector.extract_strided_slice %43 {offsets = [0, 1], sizes = [4, 15], strides = [1, 1]} : vector<4x16xf32> to vector<4x15xf32>
    %49 = vector.extract_strided_slice %43 {offsets = [0, 0], sizes = [4, 1], strides = [1, 1]} : vector<4x16xf32> to vector<4x1xf32>
    %50 = tpu.concatenate %48, %49 in 1 : vector<4x15xf32>, vector<4x1xf32> -> vector<4x16xf32>
    %51 = vector.extract_strided_slice %43 {offsets = [0, 15], sizes = [4, 1], strides = [1, 1]} : vector<4x16xf32> to vector<4x1xf32>
    %52 = vector.extract_strided_slice %43 {offsets = [0, 0], sizes = [4, 15], strides = [1, 1]} : vector<4x16xf32> to vector<4x15xf32>
    %53 = tpu.concatenate %51, %52 in 1 : vector<4x1xf32>, vector<4x15xf32> -> vector<4x16xf32>
    %54 = arith.select %47, %50, %53 : vector<4x16xi1>, vector<4x16xf32>
    %c5_i32 = arith.constant 5 : i32
    %55 = vector.broadcast %c5_i32 : i32 to vector<4x16xi32>
    %56 = arith.andi %1, %55 : vector<4x16xi32>
    %c0_i32_8 = arith.constant 0 : i32
    %57 = vector.broadcast %c0_i32_8 : i32 to vector<4x16xi32>
    %58 = arith.cmpi eq, %56, %57 : vector<4x16xi32>
    %c5_i32_9 = arith.constant 5 : i32
    %59 = vector.broadcast %c5_i32_9 : i32 to vector<4x16xi32>
    %60 = arith.cmpi eq, %56, %59 : vector<4x16xi32>
    %61 = arith.ori %58, %60 : vector<4x16xi1>
    %62 = arith.minimumf %43, %54 : vector<4x16xf32>
    %63 = arith.maximumf %43, %54 : vector<4x16xf32>
    %64 = arith.select %61, %62, %63 : vector<4x16xi1>, vector<4x16xf32>
    %c4_i32 = arith.constant 4 : i32
    %65 = vector.broadcast %c4_i32 : i32 to vector<4x16xi32>
    %66 = arith.andi %1, %65 : vector<4x16xi32>
    %c0_i32_10 = arith.constant 0 : i32
    %67 = vector.broadcast %c0_i32_10 : i32 to vector<4x16xi32>
    %68 = arith.cmpi eq, %66, %67 : vector<4x16xi32>
    %69 = vector.extract_strided_slice %64 {offsets = [0, 4], sizes = [4, 12], strides = [1, 1]} : vector<4x16xf32> to vector<4x12xf32>
    %70 = vector.extract_strided_slice %64 {offsets = [0, 0], sizes = [4, 4], strides = [1, 1]} : vector<4x16xf32> to vector<4x4xf32>
    %71 = tpu.concatenate %69, %70 in 1 : vector<4x12xf32>, vector<4x4xf32> -> vector<4x16xf32>
    %72 = vector.extract_strided_slice %64 {offsets = [0, 12], sizes = [4, 4], strides = [1, 1]} : vector<4x16xf32> to vector<4x4xf32>
    %73 = vector.extract_strided_slice %64 {offsets = [0, 0], sizes = [4, 12], strides = [1, 1]} : vector<4x16xf32> to vector<4x12xf32>
    %74 = tpu.concatenate %72, %73 in 1 : vector<4x4xf32>, vector<4x12xf32> -> vector<4x16xf32>
    %75 = arith.select %68, %71, %74 : vector<4x16xi1>, vector<4x16xf32>
    %c12_i32 = arith.constant 12 : i32
    %76 = vector.broadcast %c12_i32 : i32 to vector<4x16xi32>
    %77 = arith.andi %1, %76 : vector<4x16xi32>
    %c0_i32_11 = arith.constant 0 : i32
    %78 = vector.broadcast %c0_i32_11 : i32 to vector<4x16xi32>
    %79 = arith.cmpi eq, %77, %78 : vector<4x16xi32>
    %c12_i32_12 = arith.constant 12 : i32
    %80 = vector.broadcast %c12_i32_12 : i32 to vector<4x16xi32>
    %81 = arith.cmpi eq, %77, %80 : vector<4x16xi32>
    %82 = arith.ori %79, %81 : vector<4x16xi1>
    %83 = arith.minimumf %64, %75 : vector<4x16xf32>
    %84 = arith.maximumf %64, %75 : vector<4x16xf32>
    %85 = arith.select %82, %83, %84 : vector<4x16xi1>, vector<4x16xf32>
    %c2_i32_13 = arith.constant 2 : i32
    %86 = vector.broadcast %c2_i32_13 : i32 to vector<4x16xi32>
    %87 = arith.andi %1, %86 : vector<4x16xi32>
    %c0_i32_14 = arith.constant 0 : i32
    %88 = vector.broadcast %c0_i32_14 : i32 to vector<4x16xi32>
    %89 = arith.cmpi eq, %87, %88 : vector<4x16xi32>
    %90 = vector.extract_strided_slice %85 {offsets = [0, 2], sizes = [4, 14], strides = [1, 1]} : vector<4x16xf32> to vector<4x14xf32>
    %91 = vector.extract_strided_slice %85 {offsets = [0, 0], sizes = [4, 2], strides = [1, 1]} : vector<4x16xf32> to vector<4x2xf32>
    %92 = tpu.concatenate %90, %91 in 1 : vector<4x14xf32>, vector<4x2xf32> -> vector<4x16xf32>
    %93 = vector.extract_strided_slice %85 {offsets = [0, 14], sizes = [4, 2], strides = [1, 1]} : vector<4x16xf32> to vector<4x2xf32>
    %94 = vector.extract_strided_slice %85 {offsets = [0, 0], sizes = [4, 14], strides = [1, 1]} : vector<4x16xf32> to vector<4x14xf32>
    %95 = tpu.concatenate %93, %94 in 1 : vector<4x2xf32>, vector<4x14xf32> -> vector<4x16xf32>
    %96 = arith.select %89, %92, %95 : vector<4x16xi1>, vector<4x16xf32>
    %c10_i32 = arith.constant 10 : i32
    %97 = vector.broadcast %c10_i32 : i32 to vector<4x16xi32>
    %98 = arith.andi %1, %97 : vector<4x16xi32>
    %c0_i32_15 = arith.constant 0 : i32
    %99 = vector.broadcast %c0_i32_15 : i32 to vector<4x16xi32>
    %100 = arith.cmpi eq, %98, %99 : vector<4x16xi32>
    %c10_i32_16 = arith.constant 10 : i32
    %101 = vector.broadcast %c10_i32_16 : i32 to vector<4x16xi32>
    %102 = arith.cmpi eq, %98, %101 : vector<4x16xi32>
    %103 = arith.ori %100, %102 : vector<4x16xi1>
    %104 = arith.minimumf %85, %96 : vector<4x16xf32>
    %105 = arith.maximumf %85, %96 : vector<4x16xf32>
    %106 = arith.select %103, %104, %105 : vector<4x16xi1>, vector<4x16xf32>
    %c1_i32_17 = arith.constant 1 : i32
    %107 = vector.broadcast %c1_i32_17 : i32 to vector<4x16xi32>
    %108 = arith.andi %1, %107 : vector<4x16xi32>
    %c0_i32_18 = arith.constant 0 : i32
    %109 = vector.broadcast %c0_i32_18 : i32 to vector<4x16xi32>
    %110 = arith.cmpi eq, %108, %109 : vector<4x16xi32>
    %111 = vector.extract_strided_slice %106 {offsets = [0, 1], sizes = [4, 15], strides = [1, 1]} : vector<4x16xf32> to vector<4x15xf32>
    %112 = vector.extract_strided_slice %106 {offsets = [0, 0], sizes = [4, 1], strides = [1, 1]} : vector<4x16xf32> to vector<4x1xf32>
    %113 = tpu.concatenate %111, %112 in 1 : vector<4x15xf32>, vector<4x1xf32> -> vector<4x16xf32>
    %114 = vector.extract_strided_slice %106 {offsets = [0, 15], sizes = [4, 1], strides = [1, 1]} : vector<4x16xf32> to vector<4x1xf32>
    %115 = vector.extract_strided_slice %106 {offsets = [0, 0], sizes = [4, 15], strides = [1, 1]} : vector<4x16xf32> to vector<4x15xf32>
    %116 = tpu.concatenate %114, %115 in 1 : vector<4x1xf32>, vector<4x15xf32> -> vector<4x16xf32>
    %117 = arith.select %110, %113, %116 : vector<4x16xi1>, vector<4x16xf32>
    %c9_i32 = arith.constant 9 : i32
    %118 = vector.broadcast %c9_i32 : i32 to vector<4x16xi32>
    %119 = arith.andi %1, %118 : vector<4x16xi32>
    %c0_i32_19 = arith.constant 0 : i32
    %120 = vector.broadcast %c0_i32_19 : i32 to vector<4x16xi32>
    %121 = arith.cmpi eq, %119, %120 : vector<4x16xi32>
    %c9_i32_20 = arith.constant 9 : i32
    %122 = vector.broadcast %c9_i32_20 : i32 to vector<4x16xi32>
    %123 = arith.cmpi eq, %119, %122 : vector<4x16xi32>
    %124 = arith.ori %121, %123 : vector<4x16xi1>
    %125 = arith.minimumf %106, %117 : vector<4x16xf32>
    %126 = arith.maximumf %106, %117 : vector<4x16xf32>
    %127 = arith.select %124, %125, %126 : vector<4x16xi1>, vector<4x16xf32>
    %c8_i32 = arith.constant 8 : i32
    %128 = vector.broadcast %c8_i32 : i32 to vector<4x16xi32>
    %129 = arith.andi %1, %128 : vector<4x16xi32>
    %c0_i32_21 = arith.constant 0 : i32
    %130 = vector.broadcast %c0_i32_21 : i32 to vector<4x16xi32>
    %131 = arith.cmpi eq, %129, %130 : vector<4x16xi32>
    %132 = vector.extract_strided_slice %127 {offsets = [0, 8], sizes = [4, 8], strides = [1, 1]} : vector<4x16xf32> to vector<4x8xf32>
    %133 = vector.extract_strided_slice %127 {offsets = [0, 0], sizes = [4, 8], strides = [1, 1]} : vector<4x16xf32> to vector<4x8xf32>
    %134 = tpu.concatenate %132, %133 in 1 : vector<4x8xf32>, vector<4x8xf32> -> vector<4x16xf32>
    %135 = vector.extract_strided_slice %127 {offsets = [0, 8], sizes = [4, 8], strides = [1, 1]} : vector<4x16xf32> to vector<4x8xf32>
    %136 = vector.extract_strided_slice %127 {offsets = [0, 0], sizes = [4, 8], strides = [1, 1]} : vector<4x16xf32> to vector<4x8xf32>
    %137 = tpu.concatenate %135, %136 in 1 : vector<4x8xf32>, vector<4x8xf32> -> vector<4x16xf32>
    %138 = arith.select %131, %134, %137 : vector<4x16xi1>, vector<4x16xf32>
    %c24_i32 = arith.constant 24 : i32
    %139 = vector.broadcast %c24_i32 : i32 to vector<4x16xi32>
    %140 = arith.andi %1, %139 : vector<4x16xi32>
    %c0_i32_22 = arith.constant 0 : i32
    %141 = vector.broadcast %c0_i32_22 : i32 to vector<4x16xi32>
    %142 = arith.cmpi eq, %140, %141 : vector<4x16xi32>
    %c24_i32_23 = arith.constant 24 : i32
    %143 = vector.broadcast %c24_i32_23 : i32 to vector<4x16xi32>
    %144 = arith.cmpi eq, %140, %143 : vector<4x16xi32>
    %145 = arith.ori %142, %144 : vector<4x16xi1>
    %146 = arith.minimumf %127, %138 : vector<4x16xf32>
    %147 = arith.maximumf %127, %138 : vector<4x16xf32>
    %148 = arith.select %145, %146, %147 : vector<4x16xi1>, vector<4x16xf32>
    %c4_i32_24 = arith.constant 4 : i32
    %149 = vector.broadcast %c4_i32_24 : i32 to vector<4x16xi32>
    %150 = arith.andi %1, %149 : vector<4x16xi32>
    %c0_i32_25 = arith.constant 0 : i32
    %151 = vector.broadcast %c0_i32_25 : i32 to vector<4x16xi32>
    %152 = arith.cmpi eq, %150, %151 : vector<4x16xi32>
    %153 = vector.extract_strided_slice %148 {offsets = [0, 4], sizes = [4, 12], strides = [1, 1]} : vector<4x16xf32> to vector<4x12xf32>
    %154 = vector.extract_strided_slice %148 {offsets = [0, 0], sizes = [4, 4], strides = [1, 1]} : vector<4x16xf32> to vector<4x4xf32>
    %155 = tpu.concatenate %153, %154 in 1 : vector<4x12xf32>, vector<4x4xf32> -> vector<4x16xf32>
    %156 = vector.extract_strided_slice %148 {offsets = [0, 12], sizes = [4, 4], strides = [1, 1]} : vector<4x16xf32> to vector<4x4xf32>
    %157 = vector.extract_strided_slice %148 {offsets = [0, 0], sizes = [4, 12], strides = [1, 1]} : vector<4x16xf32> to vector<4x12xf32>
    %158 = tpu.concatenate %156, %157 in 1 : vector<4x4xf32>, vector<4x12xf32> -> vector<4x16xf32>
    %159 = arith.select %152, %155, %158 : vector<4x16xi1>, vector<4x16xf32>
    %c20_i32 = arith.constant 20 : i32
    %160 = vector.broadcast %c20_i32 : i32 to vector<4x16xi32>
    %161 = arith.andi %1, %160 : vector<4x16xi32>
    %c0_i32_26 = arith.constant 0 : i32
    %162 = vector.broadcast %c0_i32_26 : i32 to vector<4x16xi32>
    %163 = arith.cmpi eq, %161, %162 : vector<4x16xi32>
    %c20_i32_27 = arith.constant 20 : i32
    %164 = vector.broadcast %c20_i32_27 : i32 to vector<4x16xi32>
    %165 = arith.cmpi eq, %161, %164 : vector<4x16xi32>
    %166 = arith.ori %163, %165 : vector<4x16xi1>
    %167 = arith.minimumf %148, %159 : vector<4x16xf32>
    %168 = arith.maximumf %148, %159 : vector<4x16xf32>
    %169 = arith.select %166, %167, %168 : vector<4x16xi1>, vector<4x16xf32>
    %c2_i32_28 = arith.constant 2 : i32
    %170 = vector.broadcast %c2_i32_28 : i32 to vector<4x16xi32>
    %171 = arith.andi %1, %170 : vector<4x16xi32>
    %c0_i32_29 = arith.constant 0 : i32
    %172 = vector.broadcast %c0_i32_29 : i32 to vector<4x16xi32>
    %173 = arith.cmpi eq, %171, %172 : vector<4x16xi32>
    %174 = vector.extract_strided_slice %169 {offsets = [0, 2], sizes = [4, 14], strides = [1, 1]} : vector<4x16xf32> to vector<4x14xf32>
    %175 = vector.extract_strided_slice %169 {offsets = [0, 0], sizes = [4, 2], strides = [1, 1]} : vector<4x16xf32> to vector<4x2xf32>
    %176 = tpu.concatenate %174, %175 in 1 : vector<4x14xf32>, vector<4x2xf32> -> vector<4x16xf32>
    %177 = vector.extract_strided_slice %169 {offsets = [0, 14], sizes = [4, 2], strides = [1, 1]} : vector<4x16xf32> to vector<4x2xf32>
    %178 = vector.extract_strided_slice %169 {offsets = [0, 0], sizes = [4, 14], strides = [1, 1]} : vector<4x16xf32> to vector<4x14xf32>
    %179 = tpu.concatenate %177, %178 in 1 : vector<4x2xf32>, vector<4x14xf32> -> vector<4x16xf32>
    %180 = arith.select %173, %176, %179 : vector<4x16xi1>, vector<4x16xf32>
    %c18_i32 = arith.constant 18 : i32
    %181 = vector.broadcast %c18_i32 : i32 to vector<4x16xi32>
    %182 = arith.andi %1, %181 : vector<4x16xi32>
    %c0_i32_30 = arith.constant 0 : i32
    %183 = vector.broadcast %c0_i32_30 : i32 to vector<4x16xi32>
    %184 = arith.cmpi eq, %182, %183 : vector<4x16xi32>
    %c18_i32_31 = arith.constant 18 : i32
    %185 = vector.broadcast %c18_i32_31 : i32 to vector<4x16xi32>
    %186 = arith.cmpi eq, %182, %185 : vector<4x16xi32>
    %187 = arith.ori %184, %186 : vector<4x16xi1>
    %188 = arith.minimumf %169, %180 : vector<4x16xf32>
    %189 = arith.maximumf %169, %180 : vector<4x16xf32>
    %190 = arith.select %187, %188, %189 : vector<4x16xi1>, vector<4x16xf32>
    %c1_i32_32 = arith.constant 1 : i32
    %191 = vector.broadcast %c1_i32_32 : i32 to vector<4x16xi32>
    %192 = arith.andi %1, %191 : vector<4x16xi32>
    %c0_i32_33 = arith.constant 0 : i32
    %193 = vector.broadcast %c0_i32_33 : i32 to vector<4x16xi32>
    %194 = arith.cmpi eq, %192, %193 : vector<4x16xi32>
    %195 = vector.extract_strided_slice %190 {offsets = [0, 1], sizes = [4, 15], strides = [1, 1]} : vector<4x16xf32> to vector<4x15xf32>
    %196 = vector.extract_strided_slice %190 {offsets = [0, 0], sizes = [4, 1], strides = [1, 1]} : vector<4x16xf32> to vector<4x1xf32>
    %197 = tpu.concatenate %195, %196 in 1 : vector<4x15xf32>, vector<4x1xf32> -> vector<4x16xf32>
    %198 = vector.extract_strided_slice %190 {offsets = [0, 15], sizes = [4, 1], strides = [1, 1]} : vector<4x16xf32> to vector<4x1xf32>
    %199 = vector.extract_strided_slice %190 {offsets = [0, 0], sizes = [4, 15], strides = [1, 1]} : vector<4x16xf32> to vector<4x15xf32>
    %200 = tpu.concatenate %198, %199 in 1 : vector<4x1xf32>, vector<4x15xf32> -> vector<4x16xf32>
    %201 = arith.select %194, %197, %200 : vector<4x16xi1>, vector<4x16xf32>
    %c17_i32 = arith.constant 17 : i32
    %202 = vector.broadcast %c17_i32 : i32 to vector<4x16xi32>
    %203 = arith.andi %1, %202 : vector<4x16xi32>
    %c0_i32_34 = arith.constant 0 : i32
    %204 = vector.broadcast %c0_i32_34 : i32 to vector<4x16xi32>
    %205 = arith.cmpi eq, %203, %204 : vector<4x16xi32>
    %c17_i32_35 = arith.constant 17 : i32
    %206 = vector.broadcast %c17_i32_35 : i32 to vector<4x16xi32>
    %207 = arith.cmpi eq, %203, %206 : vector<4x16xi32>
    %208 = arith.ori %205, %207 : vector<4x16xi1>
    %209 = arith.minimumf %190, %201 : vector<4x16xf32>
    %210 = arith.maximumf %190, %201 : vector<4x16xf32>
    %211 = arith.select %208, %209, %210 : vector<4x16xi1>, vector<4x16xf32>
    %c0_36 = arith.constant 0 : index
    %c0_37 = arith.constant 0 : index
    %212 = vector.load %arg2[%c0_36, %c0_37] : memref<16x32xf32, #tpu.memory_space<vmem>>, vector<16x32xf32>
    %cst = arith.constant dense<0.000000e+00> : vector<4x32xf32>
    %213 = tpu.matmul %211, %212, %cst {dimension_numbers = #tpu.dot_dimension_numbers<[1], [0], [0], [1], [0, 0, 1, 1], [], []>} : vector<4x16xf32>, vector<16x32xf32>, vector<4x32xf32> -> vector<4x32xf32>
    %c0_38 = arith.constant 0 : index
    %c0_39 = arith.constant 0 : index
    %214 = vector.load %arg3[%c0_38, %c0_39] : memref<1x32xf32, #tpu.memory_space<vmem>>, vector<1x32xf32>
    %215 = vector.broadcast %214 : vector<1x32xf32> to vector<4x32xf32>
    %216 = arith.addf %213, %215 : vector<4x32xf32>
    %cst_40 = arith.constant 0.000000e+00 : f32
    %217 = vector.broadcast %cst_40 : f32 to vector<4x32xf32>
    %218 = arith.cmpf ogt, %216, %217 : vector<4x32xf32>
    %cst_41 = arith.constant 0.000000e+00 : f32
    %219 = vector.broadcast %cst_41 : f32 to vector<4x32xf32>
    %220 = arith.minimumf %216, %219 : vector<4x32xf32>
    %221 = math.exp %220 : vector<4x32xf32>
    %cst_42 = arith.constant 1.000000e+00 : f32
    %222 = vector.broadcast %cst_42 : f32 to vector<4x32xf32>
    %223 = arith.subf %221, %222 : vector<4x32xf32>
    %cst_43 = arith.constant 5.000000e-02 : f32
    %224 = vector.broadcast %cst_43 : f32 to vector<4x32xf32>
    %225 = arith.mulf %224, %223 : vector<4x32xf32>
    %226 = arith.select %218, %216, %225 : vector<4x32xi1>, vector<4x32xf32>
    %c0_44 = arith.constant 0 : index
    %c0_45 = arith.constant 0 : index
    %227 = vector.load %arg4[%c0_44, %c0_45] : memref<32x32xf32, #tpu.memory_space<vmem>>, vector<32x32xf32>
    %cst_46 = arith.constant dense<0.000000e+00> : vector<4x32xf32>
    %228 = tpu.matmul %226, %227, %cst_46 {dimension_numbers = #tpu.dot_dimension_numbers<[1], [0], [0], [1], [0, 0, 1, 1], [], []>} : vector<4x32xf32>, vector<32x32xf32>, vector<4x32xf32> -> vector<4x32xf32>
    %c0_47 = arith.constant 0 : index
    %c0_48 = arith.constant 0 : index
    %229 = vector.load %arg5[%c0_47, %c0_48] : memref<1x32xf32, #tpu.memory_space<vmem>>, vector<1x32xf32>
    %230 = vector.broadcast %229 : vector<1x32xf32> to vector<4x32xf32>
    %231 = arith.addf %228, %230 : vector<4x32xf32>
    %cst_49 = arith.constant 0.000000e+00 : f32
    %232 = vector.broadcast %cst_49 : f32 to vector<4x32xf32>
    %233 = arith.cmpf ogt, %231, %232 : vector<4x32xf32>
    %cst_50 = arith.constant 0.000000e+00 : f32
    %234 = vector.broadcast %cst_50 : f32 to vector<4x32xf32>
    %235 = arith.minimumf %231, %234 : vector<4x32xf32>
    %236 = math.exp %235 : vector<4x32xf32>
    %cst_51 = arith.constant 1.000000e+00 : f32
    %237 = vector.broadcast %cst_51 : f32 to vector<4x32xf32>
    %238 = arith.subf %236, %237 : vector<4x32xf32>
    %cst_52 = arith.constant 5.000000e-02 : f32
    %239 = vector.broadcast %cst_52 : f32 to vector<4x32xf32>
    %240 = arith.mulf %239, %238 : vector<4x32xf32>
    %241 = arith.select %233, %231, %240 : vector<4x32xi1>, vector<4x32xf32>
    %c0_53 = arith.constant 0 : index
    %c0_54 = arith.constant 0 : index
    %242 = vector.load %arg6[%c0_53, %c0_54] : memref<1x32xf32, #tpu.memory_space<vmem>>, vector<1x32xf32>
    %243 = vector.broadcast %242 : vector<1x32xf32> to vector<4x32xf32>
    %244 = arith.mulf %241, %243 : vector<4x32xf32>
    %cst_55 = arith.constant dense<0.000000e+00> : vector<4xf32>
    %245 = vector.multi_reduction <add>, %244, %cst_55 [1] : vector<4x32xf32> to vector<4xf32>
    %246 = vector.shape_cast %245 : vector<4xf32> to vector<4x1xf32>
    %c0_56 = arith.constant 0 : index
    %c0_57 = arith.constant 0 : index
    %247 = memref.load %arg7[%c0_56, %c0_57] : memref<1x1xf32, #tpu.memory_space<smem>>
    %248 = vector.broadcast %247 : f32 to vector<4x1xf32>
    %249 = arith.addf %246, %248 : vector<4x1xf32>
    %cst_58 = arith.constant 0.000000e+00 : f32
    %250 = vector.broadcast %cst_58 : f32 to vector<4x1xf32>
    %251 = arith.subf %250, %249 : vector<4x1xf32>
    %252 = math.exp %251 : vector<4x1xf32>
    %cst_59 = arith.constant 1.000000e+00 : f32
    %253 = vector.broadcast %cst_59 : f32 to vector<4x1xf32>
    %254 = arith.addf %253, %252 : vector<4x1xf32>
    %cst_60 = arith.constant 1.000000e+00 : f32
    %255 = vector.broadcast %cst_60 : f32 to vector<4x1xf32>
    %256 = arith.divf %255, %254 : vector<4x1xf32>
    %c0_61 = arith.constant 0 : index
    %c0_62 = arith.constant 0 : index
    %257 = vector.load %arg8[%c0_61, %c0_62] : memref<4x1xf32, #tpu.memory_space<vmem>>, vector<4x1xf32>
    tpu.vector_store %arg8[%c0_61, %c0_62], %256 {strides = array<i32>} : memref<4x1xf32, #tpu.memory_space<vmem>>, vector<4x1xf32>,
    return
  }
  func.func @transform_0(%arg0: i32) -> (i32, i32) {
    %c0_i32 = arith.constant 0 : i32
    %c0_i32_0 = arith.constant 0 : i32
    return %arg0, %c0_i32 : i32, i32
  }
  func.func @transform_1(%arg0: i32) -> (i32, i32) {
    %c0_i32 = arith.constant 0 : i32
    %c0_i32_0 = arith.constant 0 : i32
    %c0_i32_1 = arith.constant 0 : i32
    return %c0_i32, %c0_i32_0 : i32, i32
  }
  func.func @transform_2(%arg0: i32) -> (i32, i32) {
    %c0_i32 = arith.constant 0 : i32
    %c0_i32_0 = arith.constant 0 : i32
    %c0_i32_1 = arith.constant 0 : i32
    return %c0_i32, %c0_i32_0 : i32, i32
  }
  func.func @transform_3(%arg0: i32) -> (i32, i32) {
    %c0_i32 = arith.constant 0 : i32
    %c0_i32_0 = arith.constant 0 : i32
    %c0_i32_1 = arith.constant 0 : i32
    return %c0_i32, %c0_i32_0 : i32, i32
  }
  func.func @transform_4(%arg0: i32) -> (i32, i32) {
    %c0_i32 = arith.constant 0 : i32
    %c0_i32_0 = arith.constant 0 : i32
    %c0_i32_1 = arith.constant 0 : i32
    return %c0_i32, %c0_i32_0 : i32, i32
  }
  func.func @transform_5(%arg0: i32) -> (i32, i32) {
    %c0_i32 = arith.constant 0 : i32
    %c0_i32_0 = arith.constant 0 : i32
    %c0_i32_1 = arith.constant 0 : i32
    return %c0_i32, %c0_i32_0 : i32, i32
  }
  func.func @transform_6(%arg0: i32) -> (i32, i32) {
    %c0_i32 = arith.constant 0 : i32
    %c0_i32_0 = arith.constant 0 : i32
    %c0_i32_1 = arith.constant 0 : i32
    return %c0_i32, %c0_i32_0 : i32, i32
  }
  func.func @transform_7(%arg0: i32) -> (i32, i32) {
    %c0_i32 = arith.constant 0 : i32
    %c0_i32_0 = arith.constant 0 : i32
    return %arg0, %c0_i32 : i32, i32
  }
}

</mosaic_0001>

<llo_original>
// kernel: tpu_custom_call.1
$region0: #{tpu_custom_call.1}
  #allocation0 [shape = 'u32[]', space=smem, size = 0x4, offset = 0x4, fixed_abs, tag = 'smem constant byte address 0x4 - core index']
  #allocation1 [shape = 'u32[144,128]{1,0:T(1,128)}', space=vmem, size = 0x12000, scoped, tag = 'internal scratch']
  #allocation2 [shape = 'f32[1,1]{1,0:T(1,128)S(6)}', space=smem, size = 0x200, scoped, tag = 'scoped memory for tpu_custom_call.1']
  %s0 = inlined_call_operand.hbm [shape: f32[4,16], index: 0, kind: input, shape index: {}]
  %s1 = inlined_call_operand.hbm [shape: f32[16,32], index: 1, kind: input, shape index: {}]
  %s2 = inlined_call_operand.vmem [shape: f32[1,32], index: 2, kind: input, shape index: {}]
  %s3 = inlined_call_operand.hbm [shape: f32[32,32], index: 3, kind: input, shape index: {}]
  %s4 = inlined_call_operand.vmem [shape: f32[1,32], index: 4, kind: input, shape index: {}]
  %s5 = inlined_call_operand.vmem [shape: f32[1,32], index: 5, kind: input, shape index: {}]
  %s6 = inlined_call_operand.<no memory space> [shape: f32[1,1], index: 6, kind: input, shape index: {}]
  %s7 = inlined_call_operand.vmem [shape: f32[4,1], index: 7, kind: output, shape index: {}]
  %s8 = sld [smem:[#allocation0]]
  $region50: #{tpu_custom_call.1} parent=0
    _
  %s10 = ssub.s32 1, %s8
  %s11 = scalar_select 0, %s10, %s8
  %12 = sst [smem:[#allocation2]] %s6
  $region1: #{tpu_custom_call.1} parent=0
    #allocation3 [shape = 'u8[2048]{0}', space=vmem, size = 0x800, scoped, tag = 'input window, operand 0, single buffered']
    #allocation4 [shape = 's32[1]{0}', space=sflag, size = 0x4, scoped, tag = 'scoped memory for tpu_custom_call.1']
    #allocation5 [shape = 'u8[8192]{0}', space=vmem, size = 0x2000, scoped, tag = 'input window, operand 1, single buffered']
    #allocation6 [shape = 's32[1]{0}', space=sflag, size = 0x4, scoped, tag = 'scoped memory for tpu_custom_call.1']
    #allocation7 [shape = 'u8[16384]{0}', space=vmem, size = 0x4000, scoped, tag = 'input window, operand 3, single buffered']
    %13 = vsyncpa [#allocation4], 0
    %14 = vsyncpa [#allocation6], 0
    // Predicated region
    $region2: #{tpu_custom_call.1} parent=1 // pred_check
      _
    $region3: #{tpu_custom_call.1} parent=1 // pred_check_branch
      %16 = sbr.rel (0) target = $region5
    $region4: #{tpu_custom_call.1} parent=1 // pred_region
      %s18 = ssub.s32 64, 64
      %19 = vsyncadd [#allocation4], %s18
      %s21 = sshll.u32 [#allocation3], 4
      %s22 = int_to_ptr.vmem [resolvable:$true] %s21
      %24 = dma.hbm_to_vmem [thread:$0]  %s0, 64, %s22, [#allocation4]
    $region5: #{tpu_custom_call.1} parent=1 // pred_fallthru
      _
    // Predicated region
    $region6: #{tpu_custom_call.1} parent=1 // pred_check
      _
    $region7: #{tpu_custom_call.1} parent=1 // pred_check_branch
      %26 = sbr.rel (0) target = $region9
    $region8: #{tpu_custom_call.1} parent=1 // pred_region
      %s28 = ssub.s32 256, 256
      %29 = vsyncadd [#allocation6], %s28
      %s30 = sshll.u32 [#allocation5], 4
      %s31 = int_to_ptr.vmem [resolvable:$true] %s30
      %36 = dma.hbm_to_vmem [thread:$0]  %s1, 256, %s31, [#allocation6], 128, 128, 8
    $region9: #{tpu_custom_call.1} parent=1 // pred_fallthru
      _
    // Predicated region
    $region10: #{tpu_custom_call.1} parent=1 // pred_check
      _
    $region11: #{tpu_custom_call.1} parent=1 // pred_check_branch
      %38 = sbr.rel (0) target = $region13
    $region12: #{tpu_custom_call.1} parent=1 // pred_region
      _
    $region13: #{tpu_custom_call.1} parent=1 // pred_fallthru
      _
    // Predicated region
    $region14: #{tpu_custom_call.1} parent=1 // pred_check
      _
    $region15: #{tpu_custom_call.1} parent=1 // pred_check_branch
      %40 = sbr.rel (0) target = $region17
    $region16: #{tpu_custom_call.1} parent=1 // pred_region
      %s42 = ssub.s32 512, 512
      %43 = vsyncadd [#allocation6], %s42
      %s44 = sshll.u32 [#allocation7], 4
      %s45 = int_to_ptr.vmem [resolvable:$true] %s44
      %50 = dma.hbm_to_vmem [thread:$0]  %s3, 512, %s45, [#allocation6], 128, 128, 8
    $region17: #{tpu_custom_call.1} parent=1 // pred_fallthru
      _
    // Predicated region
    $region18: #{tpu_custom_call.1} parent=1 // pred_check
      _
    $region19: #{tpu_custom_call.1} parent=1 // pred_check_branch
      %52 = sbr.rel (0) target = $region21
    $region20: #{tpu_custom_call.1} parent=1 // pred_region
      _
    $region21: #{tpu_custom_call.1} parent=1 // pred_fallthru
      _
    // Predicated region
    $region22: #{tpu_custom_call.1} parent=1 // pred_check
      _
    $region23: #{tpu_custom_call.1} parent=1 // pred_check_branch
      %54 = sbr.rel (0) target = $region25
    $region24: #{tpu_custom_call.1} parent=1 // pred_region
      _
    $region25: #{tpu_custom_call.1} parent=1 // pred_fallthru
      _
    // Predicated region
    $region26: #{tpu_custom_call.1} parent=1 // pred_check
      _
    $region27: #{tpu_custom_call.1} parent=1 // pred_check_branch
      %56 = sbr.rel (0) target = $region29
    $region28: #{tpu_custom_call.1} parent=1 // pred_region
      _
    $region29: #{tpu_custom_call.1} parent=1 // pred_fallthru
      _
    // Predicated region
    $region30: #{tpu_custom_call.1} parent=1 // pred_check
      _
    $region31: #{tpu_custom_call.1} parent=1 // pred_check_branch
      %58 = sbr.rel (0) target = $region33
    $region32: #{tpu_custom_call.1} parent=1 // pred_region
      %59 = dma.done [#allocation4], 64
    $region33: #{tpu_custom_call.1} parent=1 // pred_fallthru
      _
    // Predicated region
    $region34: #{tpu_custom_call.1} parent=1 // pred_check
      _
    $region35: #{tpu_custom_call.1} parent=1 // pred_check_branch
      %61 = sbr.rel (0) target = $region37
    $region36: #{tpu_custom_call.1} parent=1 // pred_region
      %62 = dma.done [#allocation6], 256
    $region37: #{tpu_custom_call.1} parent=1 // pred_fallthru
      _
    // Predicated region
    $region38: #{tpu_custom_call.1} parent=1 // pred_check
      _
    $region39: #{tpu_custom_call.1} parent=1 // pred_check_branch
      %64 = sbr.rel (0) target = $region41
    $region40: #{tpu_custom_call.1} parent=1 // pred_region
      %65 = dma.done [#allocation6], 512
    $region41: #{tpu_custom_call.1} parent=1 // pred_fallthru
      _
    %v66 = vld [vmem:[#allocation3] sm:$0xf]
    %v67 = vlaneseq
    %v68 = vand.u32 %v67, 127
    %v69 = vand.u32 %v68, 1
    %vm70 = vcmp.eq.s32.totalorder %v69, 0
    %72 = vrot.lane.b32.xlu0 %v66, 127
    %v73 = vpop.permute.xlu0 %72
    %75 = vrot.lane.b32.xlu0 %v66, 15
    %v76 = vpop.permute.xlu0 %75
    %vm78 = vcmask 121856
    %v79 = vsel %vm78, %v73, %v76
    %80 = vrot.lane.b32.xlu0 %v66, 113
    %v81 = vpop.permute.xlu0 %80
    %83 = vrot.lane.b32.xlu0 %v66, 1
    %v84 = vpop.permute.xlu0 %83
    %vm86 = vcmask 7168
    %v87 = vsel %vm86, %v81, %v84
    %v88 = vsel %vm70, %v79, %v87
    %v89 = vand.u32 %v68, 3
    %vm90 = vcmp.eq.s32.totalorder %v89, 0
    %vm91 = vcmp.eq.s32.totalorder %v89, 3
    %vm92 = vmor %vm90, %vm91
    %v93 = vmin.f32 %v66, %v88
    %v94 = vmax.f32 %v66, %v88
    %v95 = vsel %vm92, %v93, %v94
    %v96 = vand.u32 %v68, 2
    %vm97 = vcmp.eq.s32.totalorder %v96, 0
    %99 = vrot.lane.b32.xlu0 %v95, 126
    %v100 = vpop.permute.xlu0 %99
    %102 = vrot.lane.b32.xlu0 %v95, 14
    %v103 = vpop.permute.xlu0 %102
    %vm105 = vcmask 113664
    %v106 = vsel %vm105, %v100, %v103
    %107 = vrot.lane.b32.xlu0 %v95, 114
    %v108 = vpop.permute.xlu0 %107
    %110 = vrot.lane.b32.xlu0 %v95, 2
    %v111 = vpop.permute.xlu0 %110
    %vm113 = vcmask 15360
    %v114 = vsel %vm113, %v108, %v111
    %v115 = vsel %vm97, %v106, %v114
    %v116 = vand.u32 %v68, 6
    %vm117 = vcmp.eq.s32.totalorder %v116, 0
    %vm118 = vcmp.eq.s32.totalorder %v116, 6
    %vm119 = vmor %vm117, %vm118
    %v120 = vmin.f32 %v95, %v115
    %v121 = vmax.f32 %v95, %v115
    %v122 = vsel %vm119, %v120, %v121
    %124 = vrot.lane.b32.xlu0 %v122, 127
    %v125 = vpop.permute.xlu0 %124
    %127 = vrot.lane.b32.xlu0 %v122, 15
    %v128 = vpop.permute.xlu0 %127
    %v130 = vsel %vm78, %v125, %v128
    %131 = vrot.lane.b32.xlu0 %v122, 113
    %v132 = vpop.permute.xlu0 %131
    %134 = vrot.lane.b32.xlu0 %v122, 1
    %v135 = vpop.permute.xlu0 %134
    %v137 = vsel %vm86, %v132, %v135
    %v138 = vsel %vm70, %v130, %v137
    %v139 = vand.u32 %v68, 5
    %vm140 = vcmp.eq.s32.totalorder %v139, 0
    %vm141 = vcmp.eq.s32.totalorder %v139, 5
    %vm142 = vmor %vm140, %vm141
    %v143 = vmin.f32 %v122, %v138
    %v144 = vmax.f32 %v122, %v138
    %v145 = vsel %vm142, %v143, %v144
    %v146 = vand.u32 %v68, 4
    %vm147 = vcmp.eq.s32.totalorder %v146, 0
    %149 = vrot.lane.b32.xlu0 %v145, 124
    %v150 = vpop.permute.xlu0 %149
    %152 = vrot.lane.b32.xlu0 %v145, 12
    %v153 = vpop.permute.xlu0 %152
    %vm155 = vcmask 97280
    %v156 = vsel %vm155, %v150, %v153
    %157 = vrot.lane.b32.xlu0 %v145, 116
    %v158 = vpop.permute.xlu0 %157
    %160 = vrot.lane.b32.xlu0 %v145, 4
    %v161 = vpop.permute.xlu0 %160
    %vm163 = vcmask 31744
    %v164 = vsel %vm163, %v158, %v161
    %v165 = vsel %vm147, %v156, %v164
    %v166 = vand.u32 %v68, 12
    %vm167 = vcmp.eq.s32.totalorder %v166, 0
    %vm168 = vcmp.eq.s32.totalorder %v166, 12
    %vm169 = vmor %vm167, %vm168
    %v170 = vmin.f32 %v145, %v165
    %v171 = vmax.f32 %v145, %v165
    %v172 = vsel %vm169, %v170, %v171
    %174 = vrot.lane.b32.xlu0 %v172, 126
    %v175 = vpop.permute.xlu0 %174
    %177 = vrot.lane.b32.xlu0 %v172, 14
    %v178 = vpop.permute.xlu0 %177
    %v180 = vsel %vm105, %v175, %v178
    %181 = vrot.lane.b32.xlu0 %v172, 114
    %v182 = vpop.permute.xlu0 %181
    %184 = vrot.lane.b32.xlu0 %v172, 2
    %v185 = vpop.permute.xlu0 %184
    %v187 = vsel %vm113, %v182, %v185
    %v188 = vsel %vm97, %v180, %v187
    %v189 = vand.u32 %v68, 10
    %vm190 = vcmp.eq.s32.totalorder %v189, 0
    %vm191 = vcmp.eq.s32.totalorder %v189, 10
    %vm192 = vmor %vm190, %vm191
    %v193 = vmin.f32 %v172, %v188
    %v194 = vmax.f32 %v172, %v188
    %v195 = vsel %vm192, %v193, %v194
    %197 = vrot.lane.b32.xlu0 %v195, 127
    %v198 = vpop.permute.xlu0 %197
    %200 = vrot.lane.b32.xlu0 %v195, 15
    %v201 = vpop.permute.xlu0 %200
    %v203 = vsel %vm78, %v198, %v201
    %204 = vrot.lane.b32.xlu0 %v195, 113
    %v205 = vpop.permute.xlu0 %204
    %207 = vrot.lane.b32.xlu0 %v195, 1
    %v208 = vpop.permute.xlu0 %207
    %v210 = vsel %vm86, %v205, %v208
    %v211 = vsel %vm70, %v203, %v210
    %v212 = vand.u32 %v68, 9
    %vm213 = vcmp.eq.s32.totalorder %v212, 0
    %vm214 = vcmp.eq.s32.totalorder %v212, 9
    %vm215 = vmor %vm213, %vm214
    %v216 = vmin.f32 %v195, %v211
    %v217 = vmax.f32 %v195, %v211
    %v218 = vsel %vm215, %v216, %v217
    %220 = vrot.lane.b32.xlu0 %v218, 120
    %v221 = vpop.permute.xlu0 %220
    %223 = vrot.lane.b32.xlu0 %v218, 8
    %v224 = vpop.permute.xlu0 %223
    %vm226 = vcmask 64512
    %v227 = vsel %vm226, %v221, %v224
    %v228 = vand.u32 %v68, 24
    %vm229 = vcmp.eq.s32.totalorder %v228, 0
    %vm230 = vcmp.eq.s32.totalorder %v228, 24
    %vm231 = vmor %vm229, %vm230
    %v232 = vmin.f32 %v218, %v227
    %v233 = vmax.f32 %v218, %v227
    %v234 = vsel %vm231, %v232, %v233
    %236 = vrot.lane.b32.xlu0 %v234, 124
    %v237 = vpop.permute.xlu0 %236
    %239 = vrot.lane.b32.xlu0 %v234, 12
    %v240 = vpop.permute.xlu0 %239
    %v242 = vsel %vm155, %v237, %v240
    %243 = vrot.lane.b32.xlu0 %v234, 116
    %v244 = vpop.permute.xlu0 %243
    %246 = vrot.lane.b32.xlu0 %v234, 4
    %v247 = vpop.permute.xlu0 %246
    %v249 = vsel %vm163, %v244, %v247
    %v250 = vsel %vm147, %v242, %v249
    %v251 = vand.u32 %v68, 20
    %vm252 = vcmp.eq.s32.totalorder %v251, 0
    %vm253 = vcmp.eq.s32.totalorder %v251, 20
    %vm254 = vmor %vm252, %vm253
    %v255 = vmin.f32 %v234, %v250
    %v256 = vmax.f32 %v234, %v250
    %v257 = vsel %vm254, %v255, %v256
    %259 = vrot.lane.b32.xlu0 %v257, 126
    %v260 = vpop.permute.xlu0 %259
    %262 = vrot.lane.b32.xlu0 %v257, 14
    %v263 = vpop.permute.xlu0 %262
    %v265 = vsel %vm105, %v260, %v263
    %266 = vrot.lane.b32.xlu0 %v257, 114
    %v267 = vpop.permute.xlu0 %266
    %269 = vrot.lane.b32.xlu0 %v257, 2
    %v270 = vpop.permute.xlu0 %269
    %v272 = vsel %vm113, %v267, %v270
    %v273 = vsel %vm97, %v265, %v272
    %v274 = vand.u32 %v68, 18
    %vm275 = vcmp.eq.s32.totalorder %v274, 0
    %vm276 = vcmp.eq.s32.totalorder %v274, 18
    %vm277 = vmor %vm275, %vm276
    %v278 = vmin.f32 %v257, %v273
    %v279 = vmax.f32 %v257, %v273
    %v280 = vsel %vm277, %v278, %v279
    %282 = vrot.lane.b32.xlu0 %v280, 127
    %v283 = vpop.permute.xlu0 %282
    %285 = vrot.lane.b32.xlu0 %v280, 15
    %v286 = vpop.permute.xlu0 %285
    %v288 = vsel %vm78, %v283, %v286
    %289 = vrot.lane.b32.xlu0 %v280, 113
    %v290 = vpop.permute.xlu0 %289
    %292 = vrot.lane.b32.xlu0 %v280, 1
    %v293 = vpop.permute.xlu0 %292
    %v295 = vsel %vm86, %v290, %v293
    %v296 = vsel %vm70, %v288, %v295
    %v297 = vand.u32 %v68, 17
    %vm298 = vcmp.eq.s32.totalorder %v297, 0
    %vm299 = vcmp.eq.s32.totalorder %v297, 17
    %vm300 = vmor %vm298, %vm299
    %v301 = vmin.f32 %v280, %v296
    %v302 = vmax.f32 %v280, %v296
    %v303 = vsel %vm300, %v301, %v302
    %v304 = vld [vmem:[#allocation5] sm:$0xff]
    %v305 = vld [vmem:[#allocation5 + $0x8] sm:$0xff]
    %v306 = vld [vmem:[%s2] sm:$0x1]
    %v308 = vlaneseq
    %v309 = vshrl.u32 %v308, 7
    %v310 = vsub.s32 0, %v309
    %v311 = vrot.slane %v306, %v310
    %vm313 = vcmask 130048
    %v315 = vsel %vm313, %v303, 0
    %317 = vmatprep.subr.mxu0 0.0
    %318 = vmatpush1.msra.mxu0 %v304
    %319 = vmatprep.subr.mxu0 0.0
    %320 = vmatpush1.msra.mxu0 %v305
    %321 = vmatprep.subr.mxu0 0.0
    %322 = vmatpush1.msra.mxu0 0.0
    %323 = vmatprep.subr.mxu0 0.0
    %324 = vmatpush1.msra.mxu0 0.0
    %325 = vmatprep.subr.mxu0 0.0
    %326 = vmatpush1.msra.mxu0 0.0
    %327 = vmatprep.subr.mxu0 0.0
    %328 = vmatpush1.msra.mxu0 0.0
    %329 = vmatprep.subr.mxu0 0.0
    %330 = vmatpush1.msra.mxu0 0.0
    %331 = vmatprep.subr.mxu0 0.0
    %332 = vmatpush1.msra.mxu0 0.0
    %333 = vmatprep.subr.mxu0 0.0
    %334 = vmatpush1.msra.mxu0 0.0
    %335 = vmatprep.subr.mxu0 0.0
    %336 = vmatpush1.msra.mxu0 0.0
    %337 = vmatprep.subr.mxu0 0.0
    %338 = vmatpush1.msra.mxu0 0.0
    %339 = vmatprep.subr.mxu0 0.0
    %340 = vmatpush1.msra.mxu0 0.0
    %341 = vmatprep.subr.mxu0 0.0
    %342 = vmatpush1.msra.mxu0 0.0
    %343 = vmatprep.subr.mxu0 0.0
    %344 = vmatpush1.msra.mxu0 0.0
    %345 = vmatprep.subr.mxu0 0.0
    %346 = vmatpush1.msra.mxu0 0.0
    %347 = vmatprep.subr.mxu0 0.0
    %348 = vmatpush1.msra.mxu0 0.0
    %349 = vmatprep.subr.mxu0 0.0
    %350 = vmatpush1.msra.mxu0 0.0
    %351 = vmatprep.subr.mxu0 0.0
    %352 = vmatpush1.msra.mxu0 0.0
    %353 = vmatprep.subr.mxu0 0.0
    %354 = vmatpush1.msra.mxu0 0.0
    %355 = vmatprep.subr.mxu0 0.0
    %356 = vmatpush1.msra.mxu0 0.0
    %357 = vmatprep.subr.mxu0 0.0
    %358 = vmatpush1.msra.mxu0 0.0
    %359 = vmatprep.subr.mxu0 0.0
    %360 = vmatpush1.msra.mxu0 0.0
    %361 = vmatprep.subr.mxu0 0.0
    %362 = vmatpush1.msra.mxu0 0.0
    %363 = vmatprep.subr.mxu0 0.0
    %364 = vmatpush1.msra.mxu0 0.0
    %365 = vmatprep.subr.mxu0 0.0
    %366 = vmatpush1.msra.mxu0 0.0
    %367 = vmatprep.subr.mxu0 0.0
    %368 = vmatpush1.msra.mxu0 0.0
    %369 = vmatprep.subr.mxu0 0.0
    %370 = vmatpush1.msra.mxu0 0.0
    %371 = vmatprep.subr.mxu0 0.0
    %372 = vmatpush1.msra.mxu0 0.0
    %373 = vmatprep.subr.mxu0 0.0
    %374 = vmatpush1.msra.mxu0 0.0
    %375 = vmatprep.subr.mxu0 0.0
    %376 = vmatpush1.msra.mxu0 0.0
    %377 = vmatprep.subr.mxu0 0.0
    %378 = vmatpush1.msra.mxu0 0.0
    %379 = vmatprep.subr.mxu0 0.0
    %380 = vmatpush1.msra.mxu0 0.0
    %381 = vmatprep.mubr.f32.mxu0 0.0
    %382 = vmatmul.mubr.f32.gmra.mrb[0].mxu0 %v315
    %v383 = vpop.f32.mrb[0].mxu0
    %v384 = vadd.f32 %v311, %v383
    %v385 = vpop.f32.mrb[0].mxu0
    %386 = vdwg.mxu0
    %vm387 = vcmp.gt.f32.partialorder %v384, 0.0
    %v388 = vmin.f32 %v384, 0.0
    %v389 = vmul.f32 %v388, 1.442695
    %v390 = vpow.pop %v389
    %v391 = vsub.f32 %v390, 1.0
    %v392 = vmul.f32 %v391, 0.05
    %v393 = vsel %vm387, %v384, %v392
    %v394 = vld [vmem:[#allocation7] sm:$0xff]
    %v395 = vld [vmem:[#allocation7 + $0x8] sm:$0xff]
    %v396 = vld [vmem:[#allocation7 + $0x10] sm:$0xff]
    %v397 = vld [vmem:[#allocation7 + $0x18] sm:$0xff]
    %v398 = vld [vmem:[%s4] sm:$0x1]
    %v400 = vlaneseq
    %v401 = vshrl.u32 %v400, 7
    %v402 = vsub.s32 0, %v401
    %v403 = vrot.slane %v398, %v402
    %vm405 = vcmask 261120
    %v407 = vsel %vm405, %v393, 0
    %409 = vmatprep.subr.mxu0 0.0
    %410 = vmatpush1.msra.mxu0 %v394
    %411 = vmatprep.subr.mxu0 0.0
    %412 = vmatpush1.msra.mxu0 %v395
    %413 = vmatprep.subr.mxu0 0.0
    %414 = vmatpush1.msra.mxu0 %v396
    %415 = vmatprep.subr.mxu0 0.0
    %416 = vmatpush1.msra.mxu0 %v397
    %417 = vmatprep.subr.mxu0 0.0
    %418 = vmatpush1.msra.mxu0 0.0
    %419 = vmatprep.subr.mxu0 0.0
    %420 = vmatpush1.msra.mxu0 0.0
    %421 = vmatprep.subr.mxu0 0.0
    %422 = vmatpush1.msra.mxu0 0.0
    %423 = vmatprep.subr.mxu0 0.0
    %424 = vmatpush1.msra.mxu0 0.0
    %425 = vmatprep.subr.mxu0 0.0
    %426 = vmatpush1.msra.mxu0 0.0
    %427 = vmatprep.subr.mxu0 0.0
    %428 = vmatpush1.msra.mxu0 0.0
    %429 = vmatprep.subr.mxu0 0.0
    %430 = vmatpush1.msra.mxu0 0.0
    %431 = vmatprep.subr.mxu0 0.0
    %432 = vmatpush1.msra.mxu0 0.0
    %433 = vmatprep.subr.mxu0 0.0
    %434 = vmatpush1.msra.mxu0 0.0
    %435 = vmatprep.subr.mxu0 0.0
    %436 = vmatpush1.msra.mxu0 0.0
    %437 = vmatprep.subr.mxu0 0.0
    %438 = vmatpush1.msra.mxu0 0.0
    %439 = vmatprep.subr.mxu0 0.0
    %440 = vmatpush1.msra.mxu0 0.0
    %441 = vmatprep.subr.mxu0 0.0
    %442 = vmatpush1.msra.mxu0 0.0
    %443 = vmatprep.subr.mxu0 0.0
    %444 = vmatpush1.msra.mxu0 0.0
    %445 = vmatprep.subr.mxu0 0.0
    %446 = vmatpush1.msra.mxu0 0.0
    %447 = vmatprep.subr.mxu0 0.0
    %448 = vmatpush1.msra.mxu0 0.0
    %449 = vmatprep.subr.mxu0 0.0
    %450 = vmatpush1.msra.mxu0 0.0
    %451 = vmatprep.subr.mxu0 0.0
    %452 = vmatpush1.msra.mxu0 0.0
    %453 = vmatprep.subr.mxu0 0.0
    %454 = vmatpush1.msra.mxu0 0.0
    %455 = vmatprep.subr.mxu0 0.0
    %456 = vmatpush1.msra.mxu0 0.0
    %457 = vmatprep.subr.mxu0 0.0
    %458 = vmatpush1.msra.mxu0 0.0
    %459 = vmatprep.subr.mxu0 0.0
    %460 = vmatpush1.msra.mxu0 0.0
    %461 = vmatprep.subr.mxu0 0.0
    %462 = vmatpush1.msra.mxu0 0.0
    %463 = vmatprep.subr.mxu0 0.0
    %464 = vmatpush1.msra.mxu0 0.0
    %465 = vmatprep.subr.mxu0 0.0
    %466 = vmatpush1.msra.mxu0 0.0
    %467 = vmatprep.subr.mxu0 0.0
    %468 = vmatpush1.msra.mxu0 0.0
    %469 = vmatprep.subr.mxu0 0.0
    %470 = vmatpush1.msra.mxu0 0.0
    %471 = vmatprep.subr.mxu0 0.0
    %472 = vmatpush1.msra.mxu0 0.0
    %473 = vmatprep.mubr.f32.mxu0 0.0
    %474 = vmatmul.mubr.f32.gmra.mrb[0].mxu0 %v407
    %v475 = vpop.f32.mrb[0].mxu0
    %v476 = vadd.f32 %v403, %v475
    %v477 = vpop.f32.mrb[0].mxu0
    %478 = vdwg.mxu0
    %vm479 = vcmp.gt.f32.partialorder %v476, 0.0
    %v480 = vmin.f32 %v476, 0.0
    %v481 = vmul.f32 %v480, 1.442695
    %v482 = vpow.pop %v481
    %v483 = vsub.f32 %v482, 1.0
    %v484 = vmul.f32 %v483, 0.05
    %v485 = vsel %vm479, %v476, %v484
    %v486 = vld [vmem:[%s5] sm:$0x1]
    %v488 = vlaneseq
    %v489 = vshrl.u32 %v488, 7
    %v490 = vsub.s32 0, %v489
    %v491 = vrot.slane %v486, %v490
    %v493 = vmul.f32 %v485, %v491
    %vm494 = vcmask 257024
    %v495 = vsel %vm494, %v493, 0.0
    %496 = vadd.xlane.f32.xlu0 %v495
    %v497 = vpop.xlane.xlu0 %496
    %s498 = sld [smem:[#allocation2]]
    %v499 = vstv %s498
    %v500 = vadd.f32 %v497, %v499
    %v501 = vsub.f32 0.0, %v500
    %v502 = vmul.f32 %v501, 1.442695
    %v503 = vpow.pop %v502
    %v504 = vadd.f32 %v503, 1.0
    %v505 = vrcp.pop %v504
    %v506 = vmul.f32 1.0, %v505
    %vm507 = vcmask 3072
    %508 = vst.msk [vmem:[%s7] sm:$0xf] %vm507, %v506
    // Predicated region
    $region42: #{tpu_custom_call.1} parent=1 // pred_check
      _
    $region43: #{tpu_custom_call.1} parent=1 // pred_check_branch
      %510 = sbr.rel (0) target = $region45
    $region44: #{tpu_custom_call.1} parent=1 // pred_region
      _
    $region45: #{tpu_custom_call.1} parent=1 // pred_fallthru
      _
    // Predicated region
    $region46: #{tpu_custom_call.1} parent=1 // pred_check
      _
    $region47: #{tpu_custom_call.1} parent=1 // pred_check_branch
      %512 = sbr.rel (0) target = $region49
    $region48: #{tpu_custom_call.1} parent=1 // pred_region
      _
    $region49: #{tpu_custom_call.1} parent=1 // pred_fallthru
      _
    %513 = vsyncpa [#allocation4], 1
    %514 = vsyncpa [#allocation6], 1

</llo_original>
